<compile_context>
chip_gen: v5e
topology: v5e:2x2
jax: 0.10.0
libtpu: 0.0.40
codegen_flags: <defaults>
</compile_context>

<pallas_src>
import functools

import jax
import jax.numpy as jnp
from jax.experimental import pallas as pl
from jax.experimental.pallas import tpu as pltpu


def _loss_sums_kernel(pred_ref, actual_ref, ps_ref, y_ref, out_ref,
                      acc1_ref, acc2_ref, *, phi, y_pow):
    pid = pl.program_id(0)

    @pl.when(pid == 0)
    def _init():
        acc1_ref[...] = jnp.zeros_like(acc1_ref)
        acc2_ref[...] = jnp.zeros_like(acc2_ref)

    # l1 loss;  loss / max(loss/phi, 1) == min(loss, phi)  (forward-exact rewrite)
    loss = jnp.abs(pred_ref[...] - actual_ref[...])
    clipped = jnp.minimum(loss, jnp.float32(phi))

    y = y_ref[...]
    yp = y if y_pow == 1 else y ** y_pow          # y_pow is a compile-time constant

    inv_ps = pl.reciprocal(ps_ref[...], approx=False)   # exact 1/ps
    term = clipped * yp * inv_ps

    # Vector accumulators (elementwise VPU adds only); defer the cross-lane reduce.
    acc1_ref[...] += term
    acc2_ref[...] += y

    @pl.when(pid == pl.num_programs(0) - 1)
    def _finalize():
        out_ref[0, 0] = jnp.sum(acc1_ref[...])    # S1 = sum(min(loss,phi) * y**p / ps)
        out_ref[0, 1] = jnp.sum(acc2_ref[...])    # S2 = sum(y)  (incl. padding, fixed later)


def _round_up(x, m):
    return ((x + m - 1) // m) * m


def _pick_tiles(n):
    """Lane-dense tile choice.  Big streaming inputs: (1024, 512) f32 tiles
    (2 MiB each -> 4 inputs x 2 pipeline buffers + 2 accumulators ~ 20 MiB, safely
    under the 32 MiB scoped-VMEM default on v5e/v6e/v7x).  Small inputs: a single
    minimal 128-lane tile to avoid useless padding."""
    big_lane, big_rows = 512, 1024
    if n >= big_lane * big_rows:
        return big_rows, big_lane
    lane = 128
    rows_needed = -(-n // lane)
    rows = min(1024, _round_up(max(rows_needed, 8), 8))
    return rows, lane


def my_loss_detached_i_dyn2(pred, actual, ps, y, *, y_pow=1, phi=0.5,
                            max_phi=5.0, phase1_end=20,
                            tile_rows=None, tile_lanes=None):
    """Forward pass of my_loss_detached_I_dyn2 (at construction time, phi == max_phi)."""
    del phase1_end                     # only affects the .step() schedule, not forward
    cur_phi = float(max_phi)           # the module sets self.phi = max_phi in __init__

    n = int(pred.size)
    if tile_rows is None or tile_lanes is None:
        tile_rows, tile_lanes = _pick_tiles(n)

    rows = _round_up(-(-n // tile_lanes), tile_rows)
    n_pad = rows * tile_lanes
    num_tiles = rows // tile_rows
    pad = n_pad - n

    def prep(x, fill):
        x = jnp.ravel(x).astype(jnp.float32)
        if pad:
            x = jnp.pad(x, (0, pad), constant_values=fill)
        return x.reshape(rows, tile_lanes)

    # Neutral padding: pred=actual=0 -> loss=0 -> clipped=0; ps=1; y=1 (S2 corrected below).
    pred2 = prep(pred, 0.0)
    actual2 = prep(actual, 0.0)
    ps2 = prep(ps, 1.0)
    y2 = prep(y, 1.0)

    kernel = functools.partial(_loss_sums_kernel, phi=cur_phi, y_pow=y_pow)

    tile_spec = pl.BlockSpec((tile_rows, tile_lanes), lambda i: (i, 0))
    sums = pl.pallas_call(
        kernel,
        out_shape=jax.ShapeDtypeStruct((1, 2), jnp.float32),
        grid=(num_tiles,),
        in_specs=[tile_spec, tile_spec, tile_spec, tile_spec],
        out_specs=pl.BlockSpec(memory_space=pltpu.SMEM),
        scratch_shapes=[
            pltpu.VMEM((tile_rows, tile_lanes), jnp.float32),
            pltpu.VMEM((tile_rows, tile_lanes), jnp.float32),
        ],
        compiler_params=pltpu.CompilerParams(
            dimension_semantics=("arbitrary",)),
    )(pred2, actual2, ps2, y2)

    s1 = sums[0, 0]
    s2 = sums[0, 1] - float(pad)       # remove padded y (= 1.0) contributions
    # y_mean**(-y_pow) = (N / S2)**y_pow ; skip the pow entirely for the common y_pow == 1
    scale = (n / s2) if y_pow == 1 else (n / s2) ** y_pow
    return s1 * scale
    # TODO(synk): optional v7x-only 2-way "parallel" leading grid axis with per-core
    # partial sums (both TensorCores); omitted here to keep a single portable kernel.


def _reference(pred, actual, ps, y, *, y_pow=1, max_phi=5.0):
    """Pure-JAX transcription of the PyTorch forward (phi == max_phi at construction)."""
    loss = jnp.abs(pred - actual)
    ratio = loss / max_phi
    i_phi = jnp.where(ratio > 1.0, ratio, jnp.ones_like(ratio))
    i_with_grad = loss / i_phi
    y_norm = (y / jnp.mean(y)) ** y_pow
    w = y_norm / ps
    return jnp.sum(i_with_grad * w)


if __name__ == "__main__":
    key = jax.random.PRNGKey(0)
    k1, k2, k3, k4 = jax.random.split(key, 4)

    def make(shape):
        pred = jax.random.normal(k1, shape, dtype=jnp.float32) * 3.0
        actual = jax.random.normal(k2, shape, dtype=jnp.float32) * 3.0
        # ps (propensity scores) and y (outcomes) strictly positive
        ps = jax.random.uniform(k3, shape, dtype=jnp.float32, minval=0.1, maxval=1.0)
        y = jax.random.uniform(k4, shape, dtype=jnp.float32, minval=0.5, maxval=2.0)
        return pred, actual, ps, y

    # 1) small, tile-aligned input (single grid step)
    p, a, s, yv = make((8, 128))
    out = jax.block_until_ready(my_loss_detached_i_dyn2(p, a, s, yv))
    ref = _reference(p, a, s, yv)
    assert jnp.allclose(out, ref, rtol=1e-5, atol=1e-4), (out, ref)

    # 2) non-aligned shape + y_pow=2 (exercises flatten/pad path and the pow path)
    p, a, s, yv = make((3, 5, 41))
    out = jax.block_until_ready(my_loss_detached_i_dyn2(p, a, s, yv, y_pow=2))
    ref = _reference(p, a, s, yv, y_pow=2)
    assert jnp.allclose(out, ref, rtol=1e-5, atol=1e-4), (out, ref)

    # 3) force a multi-step grid to exercise cross-tile accumulation / pipelining
    p, a, s, yv = make((64, 256))
    out = jax.block_until_ready(
        my_loss_detached_i_dyn2(p, a, s, yv, tile_rows=8, tile_lanes=128))
    ref = _reference(p, a, s, yv)
    assert jnp.allclose(out, ref, rtol=1e-5, atol=1e-4), (out, ref)

    print("KERNEL_OK")
</pallas_src>

<mosaic_0001>
module attributes {stable_mosaic.version = 11 : i64} {
  func.func @_loss_sums_kernel(%arg0: i32, %arg1: memref<8x128xf32, #tpu.memory_space<vmem>>, %arg2: memref<8x128xf32, #tpu.memory_space<vmem>>, %arg3: memref<8x128xf32, #tpu.memory_space<vmem>>, %arg4: memref<8x128xf32, #tpu.memory_space<vmem>>, %arg5: memref<1x2xf32, #tpu.memory_space<smem>>, %arg6: memref<8x128xf32, #tpu.memory_space<vmem>>, %arg7: memref<8x128xf32, #tpu.memory_space<vmem>>) attributes {dimension_semantics = [#tpu.dimension_semantics<arbitrary>], iteration_bounds = array<i64: 1>, scalar_prefetch = 0 : i64, scratch_operands = 2 : i64, tpu.core_type = #tpu.core_type<tc>, window_params = [{transform_indices = @transform_0, window_bounds = array<i64: 8, 128>}, {transform_indices = @transform_1, window_bounds = array<i64: 8, 128>}, {transform_indices = @transform_2, window_bounds = array<i64: 8, 128>}, {transform_indices = @transform_3, window_bounds = array<i64: 8, 128>}, {transform_indices = @transform_4, window_bounds = array<i64: 1, 2>}]} {
    %c0_i32 = arith.constant 0 : i32
    %0 = arith.cmpi eq, %arg0, %c0_i32 : i32
    %1 = arith.extui %0 : i1 to i32
    %c0_i32_0 = arith.constant 0 : i32
    %2 = arith.cmpi ne, %1, %c0_i32_0 : i32
    scf.if %2 {
      %cst_18 = arith.constant 0.000000e+00 : f32
      %23 = vector.broadcast %cst_18 : f32 to vector<8x128xf32>
      %c0_19 = arith.constant 0 : index
      %c0_20 = arith.constant 0 : index
      %24 = vector.load %arg6[%c0_19, %c0_20] : memref<8x128xf32, #tpu.memory_space<vmem>>, vector<8x128xf32>
      tpu.vector_store %arg6[%c0_19, %c0_20], %23 {strides = array<i32>} : memref<8x128xf32, #tpu.memory_space<vmem>>, vector<8x128xf32>,
      %cst_21 = arith.constant 0.000000e+00 : f32
      %25 = vector.broadcast %cst_21 : f32 to vector<8x128xf32>
      %c0_22 = arith.constant 0 : index
      %c0_23 = arith.constant 0 : index
      %26 = vector.load %arg7[%c0_22, %c0_23] : memref<8x128xf32, #tpu.memory_space<vmem>>, vector<8x128xf32>
      tpu.vector_store %arg7[%c0_22, %c0_23], %25 {strides = array<i32>} : memref<8x128xf32, #tpu.memory_space<vmem>>, vector<8x128xf32>,
    } else {
    }
    %c0 = arith.constant 0 : index
    %c0_1 = arith.constant 0 : index
    %3 = vector.load %arg1[%c0, %c0_1] : memref<8x128xf32, #tpu.memory_space<vmem>>, vector<8x128xf32>
    %c0_2 = arith.constant 0 : index
    %c0_3 = arith.constant 0 : index
    %4 = vector.load %arg2[%c0_2, %c0_3] : memref<8x128xf32, #tpu.memory_space<vmem>>, vector<8x128xf32>
    %5 = arith.subf %3, %4 : vector<8x128xf32>
    %6 = math.absf %5 : vector<8x128xf32>
    %cst = arith.constant 5.000000e+00 : f32
    %7 = vector.broadcast %cst : f32 to vector<8x128xf32>
    %8 = arith.minimumf %6, %7 : vector<8x128xf32>
    %c0_4 = arith.constant 0 : index
    %c0_5 = arith.constant 0 : index
    %9 = vector.load %arg4[%c0_4, %c0_5] : memref<8x128xf32, #tpu.memory_space<vmem>>, vector<8x128xf32>
    %c0_6 = arith.constant 0 : index
    %c0_7 = arith.constant 0 : index
    %10 = vector.load %arg3[%c0_6, %c0_7] : memref<8x128xf32, #tpu.memory_space<vmem>>, vector<8x128xf32>
    %11 = tpu.reciprocal %10 : vector<8x128xf32> -> vector<8x128xf32>
    %12 = arith.mulf %8, %9 : vector<8x128xf32>
    %13 = arith.mulf %12, %11 : vector<8x128xf32>
    %c0_8 = arith.constant 0 : index
    %c0_9 = arith.constant 0 : index
    %14 = vector.load %arg6[%c0_8, %c0_9] : memref<8x128xf32, #tpu.memory_space<vmem>>, vector<8x128xf32>
    %15 = arith.addf %14, %13 : vector<8x128xf32>
    %c0_10 = arith.constant 0 : index
    %c0_11 = arith.constant 0 : index
    %16 = vector.load %arg6[%c0_10, %c0_11] : memref<8x128xf32, #tpu.memory_space<vmem>>, vector<8x128xf32>
    tpu.vector_store %arg6[%c0_10, %c0_11], %15 {strides = array<i32>} : memref<8x128xf32, #tpu.memory_space<vmem>>, vector<8x128xf32>,
    %c0_12 = arith.constant 0 : index
    %c0_13 = arith.constant 0 : index
    %17 = vector.load %arg7[%c0_12, %c0_13] : memref<8x128xf32, #tpu.memory_space<vmem>>, vector<8x128xf32>
    %18 = arith.addf %17, %9 : vector<8x128xf32>
    %c0_14 = arith.constant 0 : index
    %c0_15 = arith.constant 0 : index
    %19 = vector.load %arg7[%c0_14, %c0_15] : memref<8x128xf32, #tpu.memory_space<vmem>>, vector<8x128xf32>
    tpu.vector_store %arg7[%c0_14, %c0_15], %18 {strides = array<i32>} : memref<8x128xf32, #tpu.memory_space<vmem>>, vector<8x128xf32>,
    %c0_i32_16 = arith.constant 0 : i32
    %20 = arith.cmpi eq, %arg0, %c0_i32_16 : i32
    %21 = arith.extui %20 : i1 to i32
    %c0_i32_17 = arith.constant 0 : i32
    %22 = arith.cmpi ne, %21, %c0_i32_17 : i32
    scf.if %22 {
      %c0_18 = arith.constant 0 : index
      %c0_19 = arith.constant 0 : index
      %23 = vector.load %arg6[%c0_18, %c0_19] : memref<8x128xf32, #tpu.memory_space<vmem>>, vector<8x128xf32>
      %24 = vector.shape_cast %23 : vector<8x128xf32> to vector<1x8x128xf32>
      %cst_20 = arith.constant dense<0.000000e+00> : vector<1xf32>
      %25 = vector.multi_reduction <add>, %24, %cst_20 [1, 2] : vector<1x8x128xf32> to vector<1xf32>
      %26 = vector.shape_cast %25 : vector<1xf32> to vector<1x1x1xf32>
      %27 = vector.extract %26[0, 0, 0] : f32 from vector<1x1x1xf32>
      %c0_21 = arith.constant 0 : index
      %c0_22 = arith.constant 0 : index
      %28 = memref.load %arg5[%c0_21, %c0_22] : memref<1x2xf32, #tpu.memory_space<smem>>
      memref.store %27, %arg5[%c0_21, %c0_22] : memref<1x2xf32, #tpu.memory_space<smem>>
      %c0_23 = arith.constant 0 : index
      %c0_24 = arith.constant 0 : index
      %29 = vector.load %arg7[%c0_23, %c0_24] : memref<8x128xf32, #tpu.memory_space<vmem>>, vector<8x128xf32>
      %30 = vector.shape_cast %29 : vector<8x128xf32> to vector<1x8x128xf32>
      %cst_25 = arith.constant dense<0.000000e+00> : vector<1xf32>
      %31 = vector.multi_reduction <add>, %30, %cst_25 [1, 2] : vector<1x8x128xf32> to vector<1xf32>
      %32 = vector.shape_cast %31 : vector<1xf32> to vector<1x1x1xf32>
      %33 = vector.extract %32[0, 0, 0] : f32 from vector<1x1x1xf32>
      %c0_26 = arith.constant 0 : index
      %c1 = arith.constant 1 : index
      %34 = memref.load %arg5[%c0_26, %c1] : memref<1x2xf32, #tpu.memory_space<smem>>
      memref.store %33, %arg5[%c0_26, %c1] : memref<1x2xf32, #tpu.memory_space<smem>>
    } else {
    }
    return
  }
  func.func @transform_0(%arg0: i32) -> (i32, i32) {
    %c0_i32 = arith.constant 0 : i32
    %c0_i32_0 = arith.constant 0 : i32
    return %arg0, %c0_i32 : i32, i32
  }
  func.func @transform_1(%arg0: i32) -> (i32, i32) {
    %c0_i32 = arith.constant 0 : i32
    %c0_i32_0 = arith.constant 0 : i32
    return %arg0, %c0_i32 : i32, i32
  }
  func.func @transform_2(%arg0: i32) -> (i32, i32) {
    %c0_i32 = arith.constant 0 : i32
    %c0_i32_0 = arith.constant 0 : i32
    return %arg0, %c0_i32 : i32, i32
  }
  func.func @transform_3(%arg0: i32) -> (i32, i32) {
    %c0_i32 = arith.constant 0 : i32
    %c0_i32_0 = arith.constant 0 : i32
    return %arg0, %c0_i32 : i32, i32
  }
  func.func @transform_4(%arg0: i32) -> (i32, i32) {
    %c0_i32 = arith.constant 0 : i32
    %c0_i32_0 = arith.constant 0 : i32
    %c0_i32_1 = arith.constant 0 : i32
    return %c0_i32, %c0_i32_0 : i32, i32
  }
}

</mosaic_0001>

<llo_original>
// kernel: tpu_custom_call.1
$region0: #{tpu_custom_call.1}
  #allocation0 [shape = 'u32[]', space=smem, size = 0x4, offset = 0x4, fixed_abs, tag = 'smem constant byte address 0x4 - core index']
  #allocation1 [shape = 'u32[72,128]{1,0:T(1,128)}', space=vmem, size = 0x9000, scoped, tag = 'internal scratch']
  #allocation2 [shape = 'f32[8,128]{1,0:T(8,128)}', space=vmem, size = 0x1000, scoped, tag = 'scratch operand']
  #allocation3 [shape = 'f32[8,128]{1,0:T(8,128)}', space=vmem, size = 0x1000, scoped, tag = 'scratch operand']
  %s0 = inlined_call_operand.hbm [shape: f32[8,128], index: 0, kind: input, shape index: {}]
  %s1 = inlined_call_operand.hbm [shape: f32[8,128], index: 1, kind: input, shape index: {}]
  %s2 = inlined_call_operand.hbm [shape: f32[8,128], index: 2, kind: input, shape index: {}]
  %s3 = inlined_call_operand.hbm [shape: f32[8,128], index: 3, kind: input, shape index: {}]
  %s4 = inlined_call_operand.hbm [shape: f32[1,2], index: 4, kind: output, shape index: {}]
  %s5 = sld [smem:[#allocation0]]
  $region50: #{tpu_custom_call.1} parent=0
    _
  %s7 = ssub.s32 1, %s5
  %s8 = scalar_select 0, %s7, %s5
  $region1: #{tpu_custom_call.1} parent=0
    #allocation4 [shape = 'u8[4096]{0}', space=vmem, size = 0x1000, scoped, tag = 'input window, operand 0, single buffered']
    #allocation5 [shape = 's32[1]{0}', space=sflag, size = 0x4, scoped, tag = 'scoped memory for tpu_custom_call.1']
    #allocation6 [shape = 's32[1]{0}', space=sflag, size = 0x4, scoped, tag = 'scoped memory for tpu_custom_call.1']
    #allocation7 [shape = 'u8[4096]{0}', space=vmem, size = 0x1000, scoped, tag = 'input window, operand 1, single buffered']
    #allocation8 [shape = 's32[1]{0}', space=sflag, size = 0x4, scoped, tag = 'scoped memory for tpu_custom_call.1']
    #allocation9 [shape = 'u8[4096]{0}', space=vmem, size = 0x1000, scoped, tag = 'input window, operand 2, single buffered']
    #allocation10 [shape = 'u8[4096]{0}', space=vmem, size = 0x1000, scoped, tag = 'input window, operand 3, single buffered']
    #allocation11 [shape = 's32[1]{0}', space=sflag, size = 0x4, scoped, tag = 'scoped memory for tpu_custom_call.1']
    #allocation12 [shape = 'u8[512]{0}', space=smem, size = 0x200, scoped, tag = 'output window, operand 0, single buffered']
    %9 = vsyncpa [#allocation5], 0
    %10 = vsyncpa [#allocation8], 0
    %11 = vsyncpa [#allocation11], 0
    %12 = vsyncpa [#allocation6], 0
    // Predicated region
    $region2: #{tpu_custom_call.1} parent=1 // pred_check
      _
    $region3: #{tpu_custom_call.1} parent=1 // pred_check_branch
      %14 = sbr.rel (0) target = $region5
    $region4: #{tpu_custom_call.1} parent=1 // pred_region
      %16 = vsyncadd [#allocation5], 0
      %s18 = sshll.u32 %s0, 4
      %s19 = int_to_ptr.hbm [resolvable:$true] %s18
      %s20 = sshll.u32 [#allocation4], 4
      %s21 = int_to_ptr.vmem [resolvable:$true] %s20
      %23 = dma.hbm_to_vmem [thread:$0]  %s19, 128, %s21, [#allocation5]
    $region5: #{tpu_custom_call.1} parent=1 // pred_fallthru
      _
    // Predicated region
    $region6: #{tpu_custom_call.1} parent=1 // pred_check
      _
    $region7: #{tpu_custom_call.1} parent=1 // pred_check_branch
      %25 = sbr.rel (0) target = $region9
    $region8: #{tpu_custom_call.1} parent=1 // pred_region
      %27 = vsyncadd [#allocation8], 0
      %s29 = sshll.u32 %s1, 4
      %s30 = int_to_ptr.hbm [resolvable:$true] %s29
      %s31 = sshll.u32 [#allocation7], 4
      %s32 = int_to_ptr.vmem [resolvable:$true] %s31
      %34 = dma.hbm_to_vmem [thread:$0]  %s30, 128, %s32, [#allocation8]
    $region9: #{tpu_custom_call.1} parent=1 // pred_fallthru
      _
    // Predicated region
    $region10: #{tpu_custom_call.1} parent=1 // pred_check
      _
    $region11: #{tpu_custom_call.1} parent=1 // pred_check_branch
      %36 = sbr.rel (0) target = $region13
    $region12: #{tpu_custom_call.1} parent=1 // pred_region
      %38 = vsyncadd [#allocation8], 0
      %s40 = sshll.u32 %s2, 4
      %s41 = int_to_ptr.hbm [resolvable:$true] %s40
      %s42 = sshll.u32 [#allocation9], 4
      %s43 = int_to_ptr.vmem [resolvable:$true] %s42
      %45 = dma.hbm_to_vmem [thread:$0]  %s41, 128, %s43, [#allocation8]
    $region13: #{tpu_custom_call.1} parent=1 // pred_fallthru
      _
    // Predicated region
    $region14: #{tpu_custom_call.1} parent=1 // pred_check
      _
    $region15: #{tpu_custom_call.1} parent=1 // pred_check_branch
      %47 = sbr.rel (0) target = $region17
    $region16: #{tpu_custom_call.1} parent=1 // pred_region
      %49 = vsyncadd [#allocation11], 0
      %s51 = sshll.u32 %s3, 4
      %s52 = int_to_ptr.hbm [resolvable:$true] %s51
      %s53 = sshll.u32 [#allocation10], 4
      %s54 = int_to_ptr.vmem [resolvable:$true] %s53
      %56 = dma.hbm_to_vmem [thread:$0]  %s52, 128, %s54, [#allocation11]
    $region17: #{tpu_custom_call.1} parent=1 // pred_fallthru
      _
    // Predicated region
    $region18: #{tpu_custom_call.1} parent=1 // pred_check
      _
    $region19: #{tpu_custom_call.1} parent=1 // pred_check_branch
      %58 = sbr.rel (0) target = $region21
    $region20: #{tpu_custom_call.1} parent=1 // pred_region
      %60 = dma.done [#allocation5], 128
    $region21: #{tpu_custom_call.1} parent=1 // pred_fallthru
      _
    // Predicated region
    $region22: #{tpu_custom_call.1} parent=1 // pred_check
      _
    $region23: #{tpu_custom_call.1} parent=1 // pred_check_branch
      %62 = sbr.rel (0) target = $region25
    $region24: #{tpu_custom_call.1} parent=1 // pred_region
      %64 = dma.done [#allocation8], 128
    $region25: #{tpu_custom_call.1} parent=1 // pred_fallthru
      _
    // Predicated region
    $region26: #{tpu_custom_call.1} parent=1 // pred_check
      _
    $region27: #{tpu_custom_call.1} parent=1 // pred_check_branch
      %66 = sbr.rel (0) target = $region29
    $region28: #{tpu_custom_call.1} parent=1 // pred_region
      %68 = dma.done [#allocation8], 128
    $region29: #{tpu_custom_call.1} parent=1 // pred_fallthru
      _
    // Predicated region
    $region30: #{tpu_custom_call.1} parent=1 // pred_check
      _
    $region31: #{tpu_custom_call.1} parent=1 // pred_check_branch
      %70 = sbr.rel (0) target = $region33
    $region32: #{tpu_custom_call.1} parent=1 // pred_region
      %72 = dma.done [#allocation11], 128
    $region33: #{tpu_custom_call.1} parent=1 // pred_fallthru
      _
    %p73 = scmp.eq.s32.totalorder 0, 0
    // Predicated region
    $region34: #{tpu_custom_call.1} parent=1 // pred_check
      %p74 = pneg %p73
    $region35: #{tpu_custom_call.1} parent=1 // pred_check_branch
      %76 = sbr.rel (%p74) target = $region37
    $region36: #{tpu_custom_call.1} parent=1 // pred_region
      %77 = vst [vmem:[#allocation2] sm:$0xff] 0.0
      %78 = vst [vmem:[#allocation3] sm:$0xff] 0.0
    $region37: #{tpu_custom_call.1} parent=1 // pred_fallthru
      _
    %v79 = vld [vmem:[#allocation4] sm:$0xff]
    %v80 = vld [vmem:[#allocation7] sm:$0xff]
    %v81 = vsub.f32 %v79, %v80
    %v82 = vand.u32 2147483647, %v81
    %v83 = vmin.f32 %v82, 5.0
    %v84 = vld [vmem:[#allocation10] sm:$0xff]
    %v85 = vld [vmem:[#allocation9] sm:$0xff]
    %v86 = vrcp.pop %v85
    %v87 = vmul.f32 %v85, %v86
    %v88 = vsub.f32 1.0, %v87
    %v89 = vmul.f32 %v86, %v88
    %v90 = vadd.f32 %v86, %v89
    %vm91 = vweird.f32 %v85
    %vm92 = vweird.f32 %v86
    %vm93 = vmor %vm91, %vm92
    %v94 = vsel %vm93, %v86, %v90
    %v95 = vand.u32 2147483647, %v85
    %vm96 = vcmp.eq.f32.partialorder %v95, 8.507059e+37
    %v97 = vand.u32 %v85, 2147483648
    %v98 = vor.u32 1.1754944e-38, %v97
    %v99 = vsel %vm96, %v98, %v94
    %v100 = vmul.f32 %v83, %v84
    %v101 = vmul.f32 %v100, %v99
    %v102 = vld [vmem:[#allocation2] sm:$0xff]
    %v103 = vadd.f32 %v102, %v101
    %104 = vst [vmem:[#allocation2] sm:$0xff] %v103
    %v105 = vld [vmem:[#allocation3] sm:$0xff]
    %v106 = vadd.f32 %v105, %v84
    %107 = vst [vmem:[#allocation3] sm:$0xff] %v106
    // Predicated region
    $region38: #{tpu_custom_call.1} parent=1 // pred_check
      %p108 = pneg %p73
    $region39: #{tpu_custom_call.1} parent=1 // pred_check_branch
      %110 = sbr.rel (%p108) target = $region41
    $region40: #{tpu_custom_call.1} parent=1 // pred_region
      %v111 = vld [vmem:[#allocation2] sm:$0xff]
      %112 = vadd.xlane.f32.xlu0 %v111
      %v113 = vpop.xlane.xlu0 %112
      %v114 = vrot.slane %v113, 4
      %v115 = vadd.f32 %v113, %v114
      %v116 = vrot.slane %v115, 2
      %v117 = vadd.f32 %v115, %v116
      %v118 = vrot.slane %v117, 1
      %v119 = vadd.f32 %v117, %v118
      %s120 = vtos %v119
      %s121 = scalar_lea.smem [#allocation12], 0
      %122 = sst [smem:[%s121]] %s120
      %v123 = vld [vmem:[#allocation3] sm:$0xff]
      %124 = vadd.xlane.f32.xlu0 %v123
      %v125 = vpop.xlane.xlu0 %124
      %v126 = vrot.slane %v125, 4
      %v127 = vadd.f32 %v125, %v126
      %v128 = vrot.slane %v127, 2
      %v129 = vadd.f32 %v127, %v128
      %v130 = vrot.slane %v129, 1
      %v131 = vadd.f32 %v129, %v130
      %s132 = vtos %v131
      %s133 = scalar_lea.smem [#allocation12], 1
      %134 = sst [smem:[%s133]] %s132
    $region41: #{tpu_custom_call.1} parent=1 // pred_fallthru
      _
    // Predicated region
    $region42: #{tpu_custom_call.1} parent=1 // pred_check
      _
    $region43: #{tpu_custom_call.1} parent=1 // pred_check_branch
      %136 = sbr.rel (0) target = $region45
    $region44: #{tpu_custom_call.1} parent=1 // pred_region
      %138 = vsyncadd [#allocation6], 0
      %s140 = sshll.u32 %s4, 4
      %s141 = int_to_ptr.hbm [resolvable:$true] %s140
      %143 = dma.smem_to_hbm [#allocation12], 16, %s141, [#allocation6]
    $region45: #{tpu_custom_call.1} parent=1 // pred_fallthru
      _
    // Predicated region
    $region46: #{tpu_custom_call.1} parent=1 // pred_check
      _
    $region47: #{tpu_custom_call.1} parent=1 // pred_check_branch
      %145 = sbr.rel (0) target = $region49
    $region48: #{tpu_custom_call.1} parent=1 // pred_region
      %147 = dma.done [#allocation6], 16
    $region49: #{tpu_custom_call.1} parent=1 // pred_fallthru
      _
    %148 = sfence
    %149 = vsyncpa [#allocation5], 1
    %150 = vsyncpa [#allocation8], 1
    %151 = vsyncpa [#allocation11], 1
    %152 = vsyncpa [#allocation6], 1

</llo_original>
